<compile_context>
chip_gen: v6e
topology: v6e:2x2x1
jax: 0.10.0
libtpu: 0.0.40
codegen_flags: <defaults>
</compile_context>

<pallas_src>
import jax
import jax.numpy as jnp
import numpy as np
from jax.experimental import pallas as pl
from jax.experimental.pallas import tpu as pltpu


# ---------------------------------------------------------------------------
# Pallas kernel: fused transfer layers + collapsed Positive_MLP.
# All per-example data has batch on the lane axis.
# ---------------------------------------------------------------------------
def ncd_decoder_kernel(
    x_ref,    # (2C+K, TB) fused stream: rows [0,2C)=z pair (T), rows [2C,2C+K)=kp (T)
    wt_ref,   # (2K, 2C)   block-diag(W_student^T, W_exercise^T)
    bt_ref,   # (2K, 1)    [b_student; b_exercise] column
    wm_ref,   # (K, 1)     collapsed Positive_MLP weight (w1 @ w2 @ w3)
    bm_ref,   # (1, 1)     collapsed Positive_MLP bias
    out_ref,  # (1, TB)    lane-dense output row
):
    two_c = wt_ref.shape[1]            # 2C
    two_k = wt_ref.shape[0]            # 2K
    k = two_k // 2

    # Static row slices of the single fused input stream (2C=32 in the demo is
    # sublane-aligned, so the slice is free).
    zcat = x_ref[:two_c, :]                              # (2C, TB) input dtype
    kp = x_ref[two_c:, :].astype(jnp.float32)            # (K, TB)  f32 upcast (VPU)

    # One MXU pass for BOTH transfer layers (block-diagonal weight),
    # f32 accumulation, then a single sigmoid over (2K, TB).
    pre = jnp.dot(wt_ref[...], zcat,
                  preferred_element_type=jnp.float32) + bt_ref[...]
    s = jax.nn.sigmoid(pre)                              # (2K, TB) f32

    # state = (sigmoid(student) - sigmoid(exercise)) * knowledge_point
    state = (s[:k, :] - s[k:, :]) * kp                   # (K, TB) f32

    # Collapsed Positive_MLP: K-length sublane reduce (XLU), lane-dense result.
    logit = jnp.sum(state * wm_ref[...], axis=0, keepdims=True) + bm_ref[...]
    out_ref[...] = jax.nn.sigmoid(logit)                 # (1, TB) f32


# ---------------------------------------------------------------------------
# Tile sizing: request large lane tiles (amortize per-step overhead, saturate
# HBM) but keep >= min_steps grid steps so pipelining / megacore get work.
# ---------------------------------------------------------------------------
def _pick_tile_b(batch, requested, min_steps=8):
    req = max(128, (int(requested) // 128) * 128)        # multiple of 128 lanes
    cap = max(128, ((pl.cdiv(int(batch), min_steps) + 127) // 128) * 128)
    return min(req, cap)


# ---------------------------------------------------------------------------
# Wrapper — equivalent of NCDDecoder.forward (eval mode), returns (B,)
# ---------------------------------------------------------------------------
def ncd_decoder_forward(z, student_id, exercise_id, knowledge_point, params,
                        config, *, tile_b=8192, input_dtype=jnp.bfloat16):
    stu_num = config["stu_num"]
    C = config["out_channels"]
    K = config["know_num"]
    B = int(student_id.shape[0])

    (ws, bs, we, be, w1, b1, w2, b2, w3, b3) = params

    tb = _pick_tile_b(B, tile_b)
    n_tiles = pl.cdiv(B, tb)

    # ---- XLA-side glue: gather + ONE narrow concat + ONE transpose ----------
    # Cast to the narrow dtype BEFORE the concat/transpose so the transpose
    # writes half the bytes; kp is 0/1 so bf16 is exact. No jnp.pad: Pallas
    # handles the ragged final block, and out[:B] already discards the tail.
    zc = z.astype(input_dtype)
    x_t = jnp.concatenate(
        [zc[student_id], zc[stu_num + exercise_id],
         knowledge_point.astype(input_dtype)], axis=1).T          # (2C+K, B)

    # Fuse the two transfer layers into one block-diagonal matmul.
    wt = jnp.zeros((2 * K, 2 * C), jnp.float32)
    wt = wt.at[:K, :C].set(ws.T).at[K:, C:].set(we.T)             # (2K, 2C)
    wt = wt.astype(input_dtype)
    bt = jnp.concatenate([bs, be], axis=1).T.astype(jnp.float32)  # (2K, 1)

    # Collapse Positive_MLP (exact algebra in eval mode; full-f32 precision).
    hp = jax.lax.Precision.HIGHEST
    wm = jnp.dot(jnp.dot(w1, w2, precision=hp), w3, precision=hp)            # (K, 1)
    bm = jnp.dot(jnp.dot(b1, w2, precision=hp) + b2, w3, precision=hp) + b3  # (1, 1)

    out = pl.pallas_call(
        ncd_decoder_kernel,
        out_shape=jax.ShapeDtypeStruct((1, B), jnp.float32),
        grid_spec=pltpu.PrefetchScalarGridSpec(
            num_scalar_prefetch=0,
            grid=(n_tiles,),
            in_specs=[
                pl.BlockSpec((2 * C + K, tb), lambda i: (0, i)),  # fused stream
                pl.BlockSpec((2 * K, 2 * C), lambda i: (0, 0)),   # wt (resident)
                pl.BlockSpec((2 * K, 1), lambda i: (0, 0)),       # bt
                pl.BlockSpec((K, 1), lambda i: (0, 0)),           # wm
                pl.BlockSpec((1, 1), lambda i: (0, 0)),           # bm
            ],
            out_specs=pl.BlockSpec((1, tb), lambda i: (0, i)),
        ),
        compiler_params=pltpu.CompilerParams(
            dimension_semantics=("parallel",),     # shards across v7x's 2 TCs
            vmem_limit_bytes=32 * 1024 * 1024,     # safe on v5e/v6e/v7x
        ),
    )(x_t, wt, bt, wm, bm)

    return out[0]


# ---------------------------------------------------------------------------
# Deterministic parameter init (xavier normal weights stored as (in, out),
# zero biases) — mirrors the PyTorch module's init.
# ---------------------------------------------------------------------------
def xavier_normal(key, fan_in, fan_out):
    std = jnp.sqrt(2.0 / (fan_in + fan_out))
    return std * jax.random.normal(key, (fan_in, fan_out), dtype=jnp.float32)


def init_params(key, config):
    C = config["out_channels"]
    K = config["know_num"]
    ks = jax.random.split(key, 5)
    ws = xavier_normal(ks[0], C, K)
    we = xavier_normal(ks[1], C, K)
    w1 = xavier_normal(ks[2], K, 128)
    w2 = xavier_normal(ks[3], 128, 64)
    w3 = xavier_normal(ks[4], 64, 1)
    bs = jnp.zeros((1, K), jnp.float32)
    be = jnp.zeros((1, K), jnp.float32)
    b1 = jnp.zeros((1, 128), jnp.float32)
    b2 = jnp.zeros((1, 64), jnp.float32)
    b3 = jnp.zeros((1, 1), jnp.float32)
    return (ws, bs, we, be, w1, b1, w2, b2, w3, b3)


# ---------------------------------------------------------------------------
# Pure-JAX reference (layer-by-layer, faithful to the PyTorch structure).
# ---------------------------------------------------------------------------
def reference_forward(z, student_id, exercise_id, knowledge_point, params, config):
    stu_num = config["stu_num"]
    (ws, bs, we, be, w1, b1, w2, b2, w3, b3) = params
    hp = jax.lax.Precision.HIGHEST
    s = jax.nn.sigmoid(z[student_id] @ ws + bs)
    e = jax.nn.sigmoid(z[stu_num + exercise_id] @ we + be)
    state = (s - e) * knowledge_point
    h1 = jnp.dot(state, w1, precision=hp) + b1           # Dropout = identity (eval)
    h2 = jnp.dot(h1, w2, precision=hp) + b2              # Dropout = identity (eval)
    h3 = jnp.dot(h2, w3, precision=hp) + b3
    return jax.nn.sigmoid(h3).reshape(-1)


if __name__ == "__main__":
    config = {
        "stu_num": 8,
        "prob_num": 8,
        "out_channels": 16,
        "know_num": 32,
    }
    B = 300   # deliberately NOT a multiple of 128 -> exercises the ragged tail block

    key = jax.random.PRNGKey(0)
    k_z, k_p, k_s, k_e, k_kp = jax.random.split(key, 5)

    # z holds stacked student + exercise node embeddings
    z = jax.random.normal(
        k_z, (config["stu_num"] + config["prob_num"], config["out_channels"]),
        dtype=jnp.float32)
    params = init_params(k_p, config)

    student_id = jax.random.randint(k_s, (B,), 0, config["stu_num"])
    exercise_id = jax.random.randint(k_e, (B,), 0, config["prob_num"])
    knowledge_point = jax.random.bernoulli(
        k_kp, 0.5, (B, config["know_num"])).astype(jnp.float32)

    ref = reference_forward(z, student_id, exercise_id, knowledge_point,
                            params, config)

    # f32 path (tight tolerance).
    out_f32 = ncd_decoder_forward(z, student_id, exercise_id, knowledge_point,
                                  params, config, input_dtype=jnp.float32)
    out_f32 = jax.block_until_ready(out_f32)
    assert out_f32.shape == (B,)
    np.testing.assert_allclose(np.asarray(out_f32), np.asarray(ref),
                               rtol=1e-4, atol=1e-5)

    # Default bf16 input path (all generations; kp is 0/1 so exact, z rounded).
    out_bf16 = ncd_decoder_forward(z, student_id, exercise_id, knowledge_point,
                                   params, config)
    out_bf16 = jax.block_until_ready(out_bf16)
    assert out_bf16.shape == (B,)
    np.testing.assert_allclose(np.asarray(out_bf16), np.asarray(ref),
                               rtol=2e-2, atol=2e-2)

    print("KERNEL_OK")
</pallas_src>

<mosaic_0001>
module attributes {stable_mosaic.version = 11 : i64} {
  func.func @ncd_decoder_kernel(%arg0: i32, %arg1: memref<64x128xf32, #tpu.memory_space<vmem>>, %arg2: memref<64x32xf32, #tpu.memory_space<vmem>>, %arg3: memref<64x1xf32, #tpu.memory_space<vmem>>, %arg4: memref<32x1xf32, #tpu.memory_space<vmem>>, %arg5: memref<1x1xf32, #tpu.memory_space<vmem>>, %arg6: memref<1x128xf32, #tpu.memory_space<vmem>>) attributes {dimension_semantics = [#tpu.dimension_semantics<parallel>], iteration_bounds = array<i64: 3>, scalar_prefetch = 0 : i64, scratch_operands = 0 : i64, tpu.core_type = #tpu.core_type<tc>, window_params = [{transform_indices = @transform_0, window_bounds = array<i64: 64, 128>}, {pipeline_mode = #tpu.pipeline_mode<synchronous>, transform_indices = @transform_1, window_bounds = array<i64: 64, 32>}, {pipeline_mode = #tpu.pipeline_mode<synchronous>, transform_indices = @transform_2, window_bounds = array<i64: 64, 1>}, {pipeline_mode = #tpu.pipeline_mode<synchronous>, transform_indices = @transform_3, window_bounds = array<i64: 32, 1>}, {pipeline_mode = #tpu.pipeline_mode<synchronous>, transform_indices = @transform_4, window_bounds = array<i64: 1, 1>}, {transform_indices = @transform_5, window_bounds = array<i64: 1, 128>}]} {
    %c0 = arith.constant 0 : index
    %c0_0 = arith.constant 0 : index
    %0 = vector.load %arg1[%c0, %c0_0] : memref<64x128xf32, #tpu.memory_space<vmem>>, vector<32x128xf32>
    %c32 = arith.constant 32 : index
    %c0_1 = arith.constant 0 : index
    %1 = vector.load %arg1[%c32, %c0_1] : memref<64x128xf32, #tpu.memory_space<vmem>>, vector<32x128xf32>
    %c0_2 = arith.constant 0 : index
    %c0_3 = arith.constant 0 : index
    %2 = vector.load %arg2[%c0_2, %c0_3] : memref<64x32xf32, #tpu.memory_space<vmem>>, vector<64x32xf32>
    %cst = arith.constant dense<0.000000e+00> : vector<64x128xf32>
    %3 = tpu.matmul %2, %0, %cst {dimension_numbers = #tpu.dot_dimension_numbers<[1], [0], [0], [1], [0, 0, 1, 1], [], []>} : vector<64x32xf32>, vector<32x128xf32>, vector<64x128xf32> -> vector<64x128xf32>
    %c0_4 = arith.constant 0 : index
    %c0_5 = arith.constant 0 : index
    %4 = vector.load %arg3[%c0_4, %c0_5] : memref<64x1xf32, #tpu.memory_space<vmem>>, vector<64x1xf32>
    %5 = vector.broadcast %4 : vector<64x1xf32> to vector<64x128xf32>
    %6 = arith.addf %3, %5 : vector<64x128xf32>
    %7 = arith.negf %6 : vector<64x128xf32>
    %8 = math.exp %7 : vector<64x128xf32>
    %cst_6 = arith.constant 1.000000e+00 : f32
    %9 = vector.broadcast %cst_6 : f32 to vector<64x128xf32>
    %10 = arith.addf %9, %8 : vector<64x128xf32>
    %11 = arith.divf %9, %10 : vector<64x128xf32>
    %12 = vector.extract_strided_slice %11 {offsets = [0, 0], sizes = [32, 128], strides = [1, 1]} : vector<64x128xf32> to vector<32x128xf32>
    %13 = vector.extract_strided_slice %11 {offsets = [32, 0], sizes = [32, 128], strides = [1, 1]} : vector<64x128xf32> to vector<32x128xf32>
    %14 = arith.subf %12, %13 : vector<32x128xf32>
    %15 = arith.mulf %14, %1 : vector<32x128xf32>
    %c0_7 = arith.constant 0 : index
    %c0_8 = arith.constant 0 : index
    %16 = vector.load %arg4[%c0_7, %c0_8] : memref<32x1xf32, #tpu.memory_space<vmem>>, vector<32x1xf32>
    %17 = vector.broadcast %16 : vector<32x1xf32> to vector<32x128xf32>
    %18 = arith.mulf %15, %17 : vector<32x128xf32>
    %cst_9 = arith.constant dense<0.000000e+00> : vector<128xf32>
    %19 = vector.multi_reduction <add>, %18, %cst_9 [0] : vector<32x128xf32> to vector<128xf32>
    %20 = vector.shape_cast %19 : vector<128xf32> to vector<1x128xf32>
    %c0_10 = arith.constant 0 : index
    %c0_11 = arith.constant 0 : index
    %21 = vector.load %arg5[%c0_10, %c0_11] : memref<1x1xf32, #tpu.memory_space<vmem>>, vector<1x1xf32>
    %22 = vector.broadcast %21 : vector<1x1xf32> to vector<1x128xf32>
    %23 = arith.addf %20, %22 : vector<1x128xf32>
    %24 = arith.negf %23 : vector<1x128xf32>
    %25 = math.exp %24 : vector<1x128xf32>
    %cst_12 = arith.constant 1.000000e+00 : f32
    %26 = vector.broadcast %cst_12 : f32 to vector<1x128xf32>
    %27 = arith.addf %26, %25 : vector<1x128xf32>
    %28 = arith.divf %26, %27 : vector<1x128xf32>
    %c0_13 = arith.constant 0 : index
    %c0_14 = arith.constant 0 : index
    %29 = vector.load %arg6[%c0_13, %c0_14] : memref<1x128xf32, #tpu.memory_space<vmem>>, vector<1x128xf32>
    tpu.vector_store %arg6[%c0_13, %c0_14], %28 {strides = array<i32>} : memref<1x128xf32, #tpu.memory_space<vmem>>, vector<1x128xf32>,
    return
  }
  func.func @transform_0(%arg0: i32) -> (i32, i32) {
    %c0_i32 = arith.constant 0 : i32
    %c0_i32_0 = arith.constant 0 : i32
    return %c0_i32, %arg0 : i32, i32
  }
  func.func @transform_1(%arg0: i32) -> (i32, i32) {
    %c0_i32 = arith.constant 0 : i32
    %c0_i32_0 = arith.constant 0 : i32
    %c0_i32_1 = arith.constant 0 : i32
    return %c0_i32, %c0_i32_0 : i32, i32
  }
  func.func @transform_2(%arg0: i32) -> (i32, i32) {
    %c0_i32 = arith.constant 0 : i32
    %c0_i32_0 = arith.constant 0 : i32
    %c0_i32_1 = arith.constant 0 : i32
    return %c0_i32, %c0_i32_0 : i32, i32
  }
  func.func @transform_3(%arg0: i32) -> (i32, i32) {
    %c0_i32 = arith.constant 0 : i32
    %c0_i32_0 = arith.constant 0 : i32
    %c0_i32_1 = arith.constant 0 : i32
    return %c0_i32, %c0_i32_0 : i32, i32
  }
  func.func @transform_4(%arg0: i32) -> (i32, i32) {
    %c0_i32 = arith.constant 0 : i32
    %c0_i32_0 = arith.constant 0 : i32
    %c0_i32_1 = arith.constant 0 : i32
    return %c0_i32, %c0_i32_0 : i32, i32
  }
  func.func @transform_5(%arg0: i32) -> (i32, i32) {
    %c0_i32 = arith.constant 0 : i32
    %c0_i32_0 = arith.constant 0 : i32
    return %c0_i32, %arg0 : i32, i32
  }
}

</mosaic_0001>

<llo_original>
// kernel: tpu_custom_call.1
$region0: #{tpu_custom_call.1}
  #allocation0 [shape = 'u32[]', space=smem, size = 0x4, offset = 0x4, fixed_abs, tag = 'smem constant byte address 0x4 - core index']
  #allocation1 [shape = 'u32[144,128]{1,0:T(1,128)}', space=vmem, size = 0x12000, scoped, tag = 'internal scratch']
  #allocation2 [shape = 'f32[1,1]{1,0:T(1,128)S(1)}', space=vmem, size = 0x200, scoped, tag = 'scoped memory for tpu_custom_call.1']
  %s0 = inlined_call_operand.vmem [shape: f32[64,300], index: 0, kind: input, shape index: {}]
  %s1 = inlined_call_operand.vmem [shape: f32[64,32], index: 1, kind: input, shape index: {}]
  %s2 = inlined_call_operand.vmem [shape: f32[64,1], index: 2, kind: input, shape index: {}]
  %s3 = inlined_call_operand.vmem [shape: f32[32,1], index: 3, kind: input, shape index: {}]
  %s4 = inlined_call_operand.<no memory space> [shape: f32[1,1], index: 4, kind: input, shape index: {}]
  %s5 = inlined_call_operand.hbm [shape: f32[1,300], index: 5, kind: output, shape index: {}]
  %s6 = sld [smem:[#allocation0]]
  $region91: #{tpu_custom_call.1} parent=0
    _
  %s8 = ssub.s32 1, %s6
  %s9 = scalar_select 0, %s8, %s6
  %v10 = vstv %s4
  %11 = vst [vmem:[#allocation2] sm:$0x1] %v10
  $region1: #{tpu_custom_call.1} parent=0
    #allocation3 [shape = 'u8[65536]{0}', space=vmem, size = 0x10000, scoped, tag = 'input window, operand 0']
    #allocation4 [shape = 'u8[1024]{0}', space=vmem, size = 0x400, scoped, tag = 'output window, operand 0']
    #allocation5 [shape = 's32[2]{0}', space=sflag, size = 0x8, scoped, tag = 'scoped memory for tpu_custom_call.1']
    %12 = vsyncpa [#allocation5], 0
    %s13 = scalar_lea.sflag [#allocation5], 1
    %14 = vsyncpa %s13, 0
    loop: start=0, step=1, limit=5
    $region2: #{tpu_custom_call.1} parent=1 // loop_pre_header
      _
    $region3: #{tpu_custom_call.1} parent=1 // loop_header
      %s16 = sphi 0, %s20
      %p17 = scmp.ge.s32.totalorder %s16, 5
      %s26 = sphi 0, %s28
      %s29 = sphi 0, %s26
      %s30 = sphi 0, %s29
      %s46 = sphi 0, %s30
      %s50 = sphi 0, %s50
      %s52 = sphi 0, %s50
      %s53 = sphi 0, %s52
      %s67 = sphi 0, %s53
      %s71 = sphi 0, %s71
      %s73 = sphi 0, %s71
      %s74 = sphi 0, %s73
      %s88 = sphi 0, %s74
      %s92 = sphi 0, %s92
      %s94 = sphi 0, %s92
      %s95 = sphi 0, %s94
      %s109 = sphi 0, %s95
      %s113 = sphi 0, %s113
      %s115 = sphi 0, %s113
      %s116 = sphi 0, %s115
      %s130 = sphi 0, %s116
      %s136 = sphi 0, %s138
      %s139 = sphi 0, %s136
      %s140 = sphi 0, %s139
      %s156 = sphi 0, %s140
    $region4: #{tpu_custom_call.1} parent=1 // loop_header_branch
      %19 = sbr.rel (%p17) target = $region8
    $region5: #{tpu_custom_call.1} parent=1 // loop_body
      %s21 = ssub.s32 %s16, 1
      %s22 = ssub.s32 %s16, 2
      %s23 = sadd.s32 %s16, 1
      %s24 = ssub.s32 %s16, %s23
      %p25 = scmp.eq.s32.totalorder %s24, 0
      %s27 = sadd.s32 %s26, 1
      %s28 = scalar_select %p25, %s26, %s27
      %p31 = pneg %p25
      %p32 = scmp.eq.s32.totalorder %s16, 2
      %p33 = por %p31, %p32
      %p34 = scmp.ne.s32.totalorder %s26, %s29
      %p35 = scmp.eq.s32.totalorder %s16, 0
      %p36 = por %p34, %p35
      %p37 = scmp.ne.s32.totalorder %s26, %s29
      %p38 = scmp.eq.s32.totalorder %s21, 2
      %p39 = por %p37, %p38
      %p40 = scmp.ne.s32.totalorder %s29, %s30
      %p41 = scmp.eq.s32.totalorder %s21, 0
      %p42 = por %p40, %p41
      %p43 = scmp.ne.s32.totalorder %s29, %s30
      %p44 = scmp.eq.s32.totalorder %s22, 2
      %p45 = por %p43, %p44
      %p47 = scmp.ne.s32.totalorder %s30, %s46
      %p48 = scmp.eq.s32.totalorder %s22, 0
      %p49 = por %p47, %p48
      %s51 = sadd.s32 %s50, 1
      %p54 = scmp.eq.s32.totalorder %s16, 2
      %p55 = scmp.ne.s32.totalorder %s50, %s52
      %p56 = scmp.eq.s32.totalorder %s16, 0
      %p57 = por %p55, %p56
      %p58 = scmp.ne.s32.totalorder %s50, %s52
      %p59 = scmp.eq.s32.totalorder %s21, 2
      %p60 = por %p58, %p59
      %p61 = scmp.ne.s32.totalorder %s52, %s53
      %p62 = scmp.eq.s32.totalorder %s21, 0
      %p63 = por %p61, %p62
      %p64 = scmp.ne.s32.totalorder %s52, %s53
      %p65 = scmp.eq.s32.totalorder %s22, 2
      %p66 = por %p64, %p65
      %p68 = scmp.ne.s32.totalorder %s53, %s67
      %p69 = scmp.eq.s32.totalorder %s22, 0
      %p70 = por %p68, %p69
      %s72 = sadd.s32 %s71, 1
      %p75 = scmp.eq.s32.totalorder %s16, 2
      %p76 = scmp.ne.s32.totalorder %s71, %s73
      %p77 = scmp.eq.s32.totalorder %s16, 0
      %p78 = por %p76, %p77
      %p79 = scmp.ne.s32.totalorder %s71, %s73
      %p80 = scmp.eq.s32.totalorder %s21, 2
      %p81 = por %p79, %p80
      %p82 = scmp.ne.s32.totalorder %s73, %s74
      %p83 = scmp.eq.s32.totalorder %s21, 0
      %p84 = por %p82, %p83
      %p85 = scmp.ne.s32.totalorder %s73, %s74
      %p86 = scmp.eq.s32.totalorder %s22, 2
      %p87 = por %p85, %p86
      %p89 = scmp.ne.s32.totalorder %s74, %s88
      %p90 = scmp.eq.s32.totalorder %s22, 0
      %p91 = por %p89, %p90
      %s93 = sadd.s32 %s92, 1
      %p96 = scmp.eq.s32.totalorder %s16, 2
      %p97 = scmp.ne.s32.totalorder %s92, %s94
      %p98 = scmp.eq.s32.totalorder %s16, 0
      %p99 = por %p97, %p98
      %p100 = scmp.ne.s32.totalorder %s92, %s94
      %p101 = scmp.eq.s32.totalorder %s21, 2
      %p102 = por %p100, %p101
      %p103 = scmp.ne.s32.totalorder %s94, %s95
      %p104 = scmp.eq.s32.totalorder %s21, 0
      %p105 = por %p103, %p104
      %p106 = scmp.ne.s32.totalorder %s94, %s95
      %p107 = scmp.eq.s32.totalorder %s22, 2
      %p108 = por %p106, %p107
      %p110 = scmp.ne.s32.totalorder %s95, %s109
      %p111 = scmp.eq.s32.totalorder %s22, 0
      %p112 = por %p110, %p111
      %s114 = sadd.s32 %s113, 1
      %p117 = scmp.eq.s32.totalorder %s16, 2
      %p118 = scmp.ne.s32.totalorder %s113, %s115
      %p119 = scmp.eq.s32.totalorder %s16, 0
      %p120 = por %p118, %p119
      %p121 = scmp.ne.s32.totalorder %s113, %s115
      %p122 = scmp.eq.s32.totalorder %s21, 2
      %p123 = por %p121, %p122
      %p124 = scmp.ne.s32.totalorder %s115, %s116
      %p125 = scmp.eq.s32.totalorder %s21, 0
      %p126 = por %p124, %p125
      %p127 = scmp.ne.s32.totalorder %s115, %s116
      %p128 = scmp.eq.s32.totalorder %s22, 2
      %p129 = por %p127, %p128
      %p131 = scmp.ne.s32.totalorder %s116, %s130
      %p132 = scmp.eq.s32.totalorder %s22, 0
      %p133 = por %p131, %p132
      %s134 = ssub.s32 %s16, %s23
      %p135 = scmp.eq.s32.totalorder %s134, 0
      %s137 = sadd.s32 %s136, 1
      %s138 = scalar_select %p135, %s136, %s137
      %p141 = pneg %p135
      %p142 = scmp.eq.s32.totalorder %s16, 2
      %p143 = por %p141, %p142
      %p144 = scmp.ne.s32.totalorder %s136, %s139
      %p145 = scmp.eq.s32.totalorder %s16, 0
      %p146 = por %p144, %p145
      %p147 = scmp.ne.s32.totalorder %s136, %s139
      %p148 = scmp.eq.s32.totalorder %s21, 2
      %p149 = por %p147, %p148
      %p150 = scmp.ne.s32.totalorder %s139, %s140
      %p151 = scmp.eq.s32.totalorder %s21, 0
      %p152 = por %p150, %p151
      %p153 = scmp.ne.s32.totalorder %s139, %s140
      %p154 = scmp.eq.s32.totalorder %s22, 2
      %p155 = por %p153, %p154
      %p157 = scmp.ne.s32.totalorder %s140, %s156
      %p158 = scmp.eq.s32.totalorder %s22, 0
      %p159 = por %p157, %p158
      %p160 = scmp.le.s32.totalorder 1, %s16
      %p161 = scmp.lt.s32.totalorder %s16, 4
      %p162 = pnand %p160, %p161
      %p163 = pneg %p162
      // Predicated region
      $region9: #{tpu_custom_call.1} parent=5 // pred_check
        _
      $region10: #{tpu_custom_call.1} parent=5 // pred_check_branch
        %165 = sbr.rel (%p162) target = $region12
      $region11: #{tpu_custom_call.1} parent=5 // pred_region
        %s166 = ssub.s32 %s16, 1
        // Predicated region
        $region13: #{tpu_custom_call.1} parent=11 // pred_check
          %p167 = pneg %p63
        $region14: #{tpu_custom_call.1} parent=11 // pred_check_branch
          %169 = sbr.rel (%p167) target = $region16
        $region15: #{tpu_custom_call.1} parent=11 // pred_region
          _
        $region16: #{tpu_custom_call.1} parent=11 // pred_fallthru
          _
        // Predicated region
        $region17: #{tpu_custom_call.1} parent=11 // pred_check
          %p170 = pneg %p84
        $region18: #{tpu_custom_call.1} parent=11 // pred_check_branch
          %172 = sbr.rel (%p170) target = $region20
        $region19: #{tpu_custom_call.1} parent=11 // pred_region
          _
        $region20: #{tpu_custom_call.1} parent=11 // pred_fallthru
          _
        // Predicated region
        $region21: #{tpu_custom_call.1} parent=11 // pred_check
          %p173 = pneg %p105
        $region22: #{tpu_custom_call.1} parent=11 // pred_check_branch
          %175 = sbr.rel (%p173) target = $region24
        $region23: #{tpu_custom_call.1} parent=11 // pred_region
          _
        $region24: #{tpu_custom_call.1} parent=11 // pred_fallthru
          _
        // Predicated region
        $region25: #{tpu_custom_call.1} parent=11 // pred_check
          %p176 = pneg %p126
        $region26: #{tpu_custom_call.1} parent=11 // pred_check_branch
          %178 = sbr.rel (%p176) target = $region28
        $region27: #{tpu_custom_call.1} parent=11 // pred_region
          _
        $region28: #{tpu_custom_call.1} parent=11 // pred_fallthru
          _
      $region12: #{tpu_custom_call.1} parent=5 // pred_fallthru
        _
      %p179 = scmp.lt.s32.totalorder %s16, 3
      // Predicated region
      $region29: #{tpu_custom_call.1} parent=5 // pred_check
        %p180 = pneg %p179
      $region30: #{tpu_custom_call.1} parent=5 // pred_check_branch
        %182 = sbr.rel (%p180) target = $region32
      $region31: #{tpu_custom_call.1} parent=5 // pred_region
        // Predicated region
        $region33: #{tpu_custom_call.1} parent=31 // pred_check
          %p183 = pneg %p36
        $region34: #{tpu_custom_call.1} parent=31 // pred_check_branch
          %185 = sbr.rel (%p183) target = $region36
        $region35: #{tpu_custom_call.1} parent=31 // pred_region
          %s186 = sand.u32 %s26, 1
          %s187 = sand.u32 %s26, 1
          %s188 = smul.addr %s187, 64
          %s189 = scalar_lea.vmem [#allocation3], %s188
          %s190 = smul.addr %s16, 8
          %s191 = scalar_lea.vmem %s0, %s190
          // Predicated region
          $region37: #{tpu_custom_call.1} parent=35 // pred_check
            _
          $region38: #{tpu_custom_call.1} parent=35 // pred_check_branch
            %193 = sbr.rel (0) target = $region40
          $region39: #{tpu_custom_call.1} parent=35 // pred_region
            // Predicated region
            $region41: #{tpu_custom_call.1} parent=39 // pred_check
              _
            $region42: #{tpu_custom_call.1} parent=39 // pred_check_branch
              %195 = sbr.rel (0) target = $region44
            $region43: #{tpu_custom_call.1} parent=39 // pred_region
              // Predicated region
              $region56: #{tpu_custom_call.1} parent=43 // pred_check
                _
              $region57: #{tpu_custom_call.1} parent=43 // pred_check_branch
                %225 = sbr.rel (0) target = $region59
              $region58: #{tpu_custom_call.1} parent=43 // pred_region
                loop: start=0, step=1, limit=1
                $region60: #{tpu_custom_call.1} parent=58 // loop_pre_header
                  _
                $region61: #{tpu_custom_call.1} parent=58 // loop_header
                  %s227 = sphi 0, %s231
                  %p228 = scmp.ge.s32.totalorder %s227, 1
                  %s232 = sphi %s191, %s191
                  %s233 = sphi %s189, %s189
                $region62: #{tpu_custom_call.1} parent=58 // loop_header_branch
                  %230 = sbr.rel (%p228) target = $region66
                $region63: #{tpu_custom_call.1} parent=58 // loop_body
                  %v234 = vld [vmem:[%s232] sm:$0xff]
                  %235 = vst [vmem:[%s233] sm:$0xff] %v234
                  %v236 = vld [vmem:[%s232 + $0x18] sm:$0xff]
                  %237 = vst [vmem:[%s233 + $0x8] sm:$0xff] %v236
                  %v238 = vld [vmem:[%s232 + $0x30] sm:$0xff]
                  %239 = vst [vmem:[%s233 + $0x10] sm:$0xff] %v238
                  %v240 = vld [vmem:[%s232 + $0x48] sm:$0xff]
                  %241 = vst [vmem:[%s233 + $0x18] sm:$0xff] %v240
                  %v242 = vld [vmem:[%s232 + $0x60] sm:$0xff]
                  %243 = vst [vmem:[%s233 + $0x20] sm:$0xff] %v242
                  %v244 = vld [vmem:[%s232 + $0x78] sm:$0xff]
                  %245 = vst [vmem:[%s233 + $0x28] sm:$0xff] %v244
                  %v246 = vld [vmem:[%s232 + $0x90] sm:$0xff]
                  %247 = vst [vmem:[%s233 + $0x30] sm:$0xff] %v246
                  %v248 = vld [vmem:[%s232 + $0xa8] sm:$0xff]
                  %249 = vst [vmem:[%s233 + $0x38] sm:$0xff] %v248
                $region64: #{tpu_custom_call.1} parent=58 // loop_footer
                  %s231 = sadd.s32 1, %s227
                $region65: #{tpu_custom_call.1} parent=58 // loop_footer_branch
                  %226 = sbr.rel target = $region61
                $region66: #{tpu_custom_call.1} parent=58 // loop_exit
                  _
              $region59: #{tpu_custom_call.1} parent=43 // pred_fallthru
                _
              // Predicated region
              $region67: #{tpu_custom_call.1} parent=43 // pred_check
                _
              $region68: #{tpu_custom_call.1} parent=43 // pred_check_branch
                %251 = sbr.rel target = $region70
              $region69: #{tpu_custom_call.1} parent=43 // pred_region
                _
              $region70: #{tpu_custom_call.1} parent=43 // pred_fallthru
                _
            $region44: #{tpu_custom_call.1} parent=39 // pred_fallthru
              _
            // Predicated region
            $region45: #{tpu_custom_call.1} parent=39 // pred_check
              _
            $region46: #{tpu_custom_call.1} parent=39 // pred_check_branch
              %197 = sbr.rel target = $region48
            $region47: #{tpu_custom_call.1} parent=39 // pred_region
              %s199 = ssub.s32 256, 1
              loop: start=0, step=1, limit=1
              $region49: #{tpu_custom_call.1} parent=47 // loop_pre_header
                _
              $region50: #{tpu_custom_call.1} parent=47 // loop_header
                %s201 = sphi 0, %s205
                %p202 = scmp.ge.s32.totalorder %s201, 1
                %s206 = sphi %s191, %s191
                %s207 = sphi %s189, %s189
              $region51: #{tpu_custom_call.1} parent=47 // loop_header_branch
                %204 = sbr.rel (%p202) target = $region55
              $region52: #{tpu_custom_call.1} parent=47 // loop_body
                %v208 = vld [vmem:[%s206] sm:%s199]
                %209 = vst [vmem:[%s207] sm:%s199] %v208
                %v210 = vld [vmem:[%s206 + $0x18] sm:%s199]
                %211 = vst [vmem:[%s207 + $0x8] sm:%s199] %v210
                %v212 = vld [vmem:[%s206 + $0x30] sm:%s199]
                %213 = vst [vmem:[%s207 + $0x10] sm:%s199] %v212
                %v214 = vld [vmem:[%s206 + $0x48] sm:%s199]
                %215 = vst [vmem:[%s207 + $0x18] sm:%s199] %v214
                %v216 = vld [vmem:[%s206 + $0x60] sm:%s199]
                %217 = vst [vmem:[%s207 + $0x20] sm:%s199] %v216
                %v218 = vld [vmem:[%s206 + $0x78] sm:%s199]
                %219 = vst [vmem:[%s207 + $0x28] sm:%s199] %v218
                %v220 = vld [vmem:[%s206 + $0x90] sm:%s199]
                %221 = vst [vmem:[%s207 + $0x30] sm:%s199] %v220
                %v222 = vld [vmem:[%s206 + $0xa8] sm:%s199]
                %223 = vst [vmem:[%s207 + $0x38] sm:%s199] %v222
              $region53: #{tpu_custom_call.1} parent=47 // loop_footer
                %s205 = sadd.s32 1, %s201
              $region54: #{tpu_custom_call.1} parent=47 // loop_footer_branch
                %200 = sbr.rel target = $region50
              $region55: #{tpu_custom_call.1} parent=47 // loop_exit
                _
            $region48: #{tpu_custom_call.1} parent=39 // pred_fallthru
              _
          $region40: #{tpu_custom_call.1} parent=35 // pred_fallthru
            _
          %252 = vnop
        $region36: #{tpu_custom_call.1} parent=31 // pred_fallthru
          _
      $region32: #{tpu_custom_call.1} parent=5 // pred_fallthru
        _
      %p253 = scmp.le.s32.totalorder 1, %s16
      %p254 = scmp.lt.s32.totalorder %s16, 4
      %p255 = pnand %p253, %p254
      %p256 = pneg %p255
      // Predicated region
      $region71: #{tpu_custom_call.1} parent=5 // pred_check
        _
      $region72: #{tpu_custom_call.1} parent=5 // pred_check_branch
        %258 = sbr.rel (%p255) target = $region74
      $region73: #{tpu_custom_call.1} parent=5 // pred_region
        %s259 = ssub.s32 %s16, 1
        %s260 = sand.u32 %s29, 1
        %s261 = sand.u32 %s29, 1
        %s262 = smul.addr %s261, 64
        %s263 = scalar_lea.vmem [#allocation3], %s262
        // Predicated region
        $region75: #{tpu_custom_call.1} parent=73 // pred_check
          %p264 = pneg %p42
        $region76: #{tpu_custom_call.1} parent=73 // pred_check_branch
          %266 = sbr.rel (%p264) target = $region78
        $region77: #{tpu_custom_call.1} parent=73 // pred_region
          _
        $region78: #{tpu_custom_call.1} parent=73 // pred_fallthru
          _
        %s267 = sand.u32 %s29, 1
        %s268 = sand.u32 %s29, 1
        %s269 = smul.addr %s268, 64
        %s270 = scalar_lea.vmem [#allocation3], %s269
        %p271 = pneg %p42
        %p272 = pneg %p39
        %p273 = pneg %p63
        %p274 = pneg %p60
        %p275 = pneg %p84
        %p276 = pneg %p81
        %p277 = pneg %p105
        %p278 = pneg %p102
        %p279 = pneg %p126
        %p280 = pneg %p123
        %p281 = pneg %p152
        %p282 = pneg %p149
        %s283 = sand.u32 %s139, 1
        %s284 = scalar_lea.sflag [#allocation5], %s283
        %s285 = sand.u32 %s139, 1
        %s286 = scalar_lea.vmem [#allocation4], %s285
        %v287 = vld [vmem:[%s263] sm:$0xff]
        %v288 = vld [vmem:[%s263 + $0x8] sm:$0xff]
        %v289 = vld [vmem:[%s263 + $0x10] sm:$0xff]
        %v290 = vld [vmem:[%s263 + $0x18] sm:$0xff]
        %v291 = vld [vmem:[%s263 + $0x20] sm:$0xff]
        %v292 = vld [vmem:[%s263 + $0x28] sm:$0xff]
        %v293 = vld [vmem:[%s263 + $0x30] sm:$0xff]
        %v294 = vld [vmem:[%s263 + $0x38] sm:$0xff]
        %v295 = vld [vmem:[%s1] sm:$0xff]
        %v296 = vld [vmem:[%s1 + $0x8] sm:$0xff]
        %v297 = vld [vmem:[%s1 + $0x10] sm:$0xff]
        %v298 = vld [vmem:[%s1 + $0x18] sm:$0xff]
        %v299 = vld [vmem:[%s1 + $0x20] sm:$0xff]
        %v300 = vld [vmem:[%s1 + $0x28] sm:$0xff]
        %v301 = vld [vmem:[%s1 + $0x30] sm:$0xff]
        %v302 = vld [vmem:[%s1 + $0x38] sm:$0xff]
        %v303 = vld [vmem:[%s2] sm:$0xff]
        %v304 = vld [vmem:[%s2 + $0x8] sm:$0xff]
        %v305 = vld [vmem:[%s2 + $0x10] sm:$0xff]
        %v306 = vld [vmem:[%s2 + $0x18] sm:$0xff]
        %v307 = vld [vmem:[%s2 + $0x20] sm:$0xff]
        %v308 = vld [vmem:[%s2 + $0x28] sm:$0xff]
        %v309 = vld [vmem:[%s2 + $0x30] sm:$0xff]
        %v310 = vld [vmem:[%s2 + $0x38] sm:$0xff]
        %312 = vset.pattern.permute.xlu0 0
        %313 = vperm.xlu0 %312, %v303
        %v314 = vpop.permute.xlu0 %313
        %317 = vset.pattern.permute.xlu0 0
        %318 = vperm.xlu0 %317, %v304
        %v319 = vpop.permute.xlu0 %318
        %322 = vset.pattern.permute.xlu0 0
        %323 = vperm.xlu0 %322, %v305
        %v324 = vpop.permute.xlu0 %323
        %327 = vset.pattern.permute.xlu0 0
        %328 = vperm.xlu0 %327, %v306
        %v329 = vpop.permute.xlu0 %328
        %332 = vset.pattern.permute.xlu0 0
        %333 = vperm.xlu0 %332, %v307
        %v334 = vpop.permute.xlu0 %333
        %337 = vset.pattern.permute.xlu0 0
        %338 = vperm.xlu0 %337, %v308
        %v339 = vpop.permute.xlu0 %338
        %342 = vset.pattern.permute.xlu0 0
        %343 = vperm.xlu0 %342, %v309
        %v344 = vpop.permute.xlu0 %343
        %347 = vset.pattern.permute.xlu0 0
        %348 = vperm.xlu0 %347, %v310
        %v349 = vpop.permute.xlu0 %348
        %vm351 = vcmask 261120
        %v353 = vsel %vm351, %v295, 0
        %v356 = vsel %vm351, %v296, 0
        %v359 = vsel %vm351, %v297, 0
        %v362 = vsel %vm351, %v298, 0
        %v365 = vsel %vm351, %v299, 0
        %v368 = vsel %vm351, %v300, 0
        %v371 = vsel %vm351, %v301, 0
        %v374 = vsel %vm351, %v302, 0
        %376 = vmatprep.subr.mxu0 0.0
        %377 = vmatpush1.msra.mxu0 0.0
        %378 = vmatprep.subr.mxu0 0.0
        %379 = vmatpush1.msra.mxu0 0.0
        %380 = vmatprep.subr.mxu0 0.0
        %381 = vmatpush1.msra.mxu0 0.0
        %382 = vmatprep.subr.mxu0 0.0
        %383 = vmatpush1.msra.mxu0 0.0
        %384 = vmatprep.subr.mxu0 0.0
        %385 = vmatpush1.msra.mxu0 0.0
        %386 = vmatprep.subr.mxu0 0.0
        %387 = vmatpush1.msra.mxu0 0.0
        %388 = vmatprep.subr.mxu0 0.0
        %389 = vmatpush1.msra.mxu0 0.0
        %390 = vmatprep.subr.mxu0 0.0
        %391 = vmatpush1.msra.mxu0 0.0
        %392 = vmatprep.subr.mxu0 0.0
        %393 = vmatpush1.msra.mxu0 0.0
        %394 = vmatprep.subr.mxu0 0.0
        %395 = vmatpush1.msra.mxu0 0.0
        %396 = vmatprep.subr.mxu0 0.0
        %397 = vmatpush1.msra.mxu0 0.0
        %398 = vmatprep.subr.mxu0 0.0
        %399 = vmatpush1.msra.mxu0 0.0
        %400 = vmatprep.subr.mxu0 0.0
        %401 = vmatpush1.msra.mxu0 %v290
        %402 = vmatprep.subr.mxu0 0.0
        %403 = vmatpush1.msra.mxu0 %v289
        %404 = vmatprep.subr.mxu0 0.0
        %405 = vmatpush1.msra.mxu0 %v288
        %406 = vmatprep.subr.mxu0 0.0
        %407 = vmatpush1.msra.mxu0 %v287
        %408 = vmatprep.subr.mxu0 0.0
        %409 = vmatpush2.msra.mxu0 0.0
        %410 = vmatprep.subr.mxu0 0.0
        %411 = vmatpush2.msra.mxu0 0.0
        %412 = vmatprep.subr.mxu0 0.0
        %413 = vmatpush2.msra.mxu0 0.0
        %414 = vmatprep.subr.mxu0 0.0
        %415 = vmatpush2.msra.mxu0 0.0
        %416 = vmatprep.subr.mxu0 0.0
        %417 = vmatpush2.msra.mxu0 0.0
        %418 = vmatprep.subr.mxu0 0.0
        %419 = vmatpush2.msra.mxu0 0.0
        %420 = vmatprep.subr.mxu0 0.0
        %421 = vmatpush2.msra.mxu0 0.0
        %422 = vmatprep.subr.mxu0 0.0
        %423 = vmatpush2.msra.mxu0 0.0
        %424 = vmatprep.subr.mxu0 0.0
        %425 = vmatpush2.msra.mxu0 0.0
        %426 = vmatprep.subr.mxu0 0.0
        %427 = vmatpush2.msra.mxu0 0.0
        %428 = vmatprep.subr.mxu0 0.0
        %429 = vmatpush2.msra.mxu0 0.0
        %430 = vmatprep.subr.mxu0 0.0
        %431 = vmatpush2.msra.mxu0 0.0
        %432 = vmatprep.subr.mxu0 0.0
        %433 = vmatpush2.msra.mxu0 0.0
        %434 = vmatprep.subr.mxu0 0.0
        %435 = vmatpush2.msra.mxu0 0.0
        %436 = vmatprep.subr.mxu0 0.0
        %437 = vmatpush2.msra.mxu0 0.0
        %438 = vmatprep.subr.mxu0 0.0
        %439 = vmatpush2.msra.mxu0 0.0
        %440 = vmatprep.mubr.f32.mxu0 0.0
        %441 = vmatmul.mubr.f32.gmra.mxu0 %v353
        %v442 = vpop.f32.mrf.mxu0
        %v443 = vadd.f32 %v314, %v442
        %v444 = vpop.f32.mrf.mxu0
        %445 = vmatprep.mubr.f32.mxu0 0.0
        %446 = vmatmul.mubr.f32.gmra.mxu0 %v356
        %v447 = vpop.f32.mrf.mxu0
        %v448 = vadd.f32 %v319, %v447
        %v449 = vpop.f32.mrf.mxu0
        %450 = vmatprep.mubr.f32.mxu0 0.0
        %451 = vmatmul.mubr.f32.gmra.mxu0 %v359
        %v452 = vpop.f32.mrf.mxu0
        %v453 = vadd.f32 %v324, %v452
        %v454 = vpop.f32.mrf.mxu0
        %455 = vmatprep.mubr.f32.mxu0 0.0
        %456 = vmatmul.mubr.f32.gmra.mxu0 %v362
        %v457 = vpop.f32.mrf.mxu0
        %v458 = vadd.f32 %v329, %v457
        %v459 = vpop.f32.mrf.mxu0
        %460 = vmatprep.mubr.f32.mxu0 0.0
        %461 = vmatmul.mubr.f32.gmra.mxu0 %v365
        %v462 = vpop.f32.mrf.mxu0
        %v463 = vadd.f32 %v334, %v462
        %v464 = vpop.f32.mrf.mxu0
        %465 = vmatprep.mubr.f32.mxu0 0.0
        %466 = vmatmul.mubr.f32.gmra.mxu0 %v368
        %v467 = vpop.f32.mrf.mxu0
        %v468 = vadd.f32 %v339, %v467
        %v469 = vpop.f32.mrf.mxu0
        %470 = vmatprep.mubr.f32.mxu0 0.0
        %471 = vmatmul.mubr.f32.gmra.mxu0 %v371
        %v472 = vpop.f32.mrf.mxu0
        %v473 = vadd.f32 %v344, %v472
        %v474 = vpop.f32.mrf.mxu0
        %475 = vmatprep.mubr.f32.mxu0 0.0
        %476 = vmatmul.mubr.f32.gmra.mxu0 %v374
        %v477 = vpop.f32.mrf.mxu0
        %v478 = vadd.f32 %v349, %v477
        %v479 = vpop.f32.mrf.mxu0
        %480 = vdwg.mxu0
        %v481 = vxor.u32 %v443, 2147483648
        %v482 = vxor.u32 %v448, 2147483648
        %v483 = vxor.u32 %v453, 2147483648
        %v484 = vxor.u32 %v458, 2147483648
        %v485 = vxor.u32 %v463, 2147483648
        %v486 = vxor.u32 %v468, 2147483648
        %v487 = vxor.u32 %v473, 2147483648
        %v488 = vxor.u32 %v478, 2147483648
        %v489 = vmul.f32 %v481, 1.442695
        %v490 = vpow.pop %v489
        %v491 = vmul.f32 %v482, 1.442695
        %v492 = vpow.pop %v491
        %v493 = vmul.f32 %v483, 1.442695
        %v494 = vpow.pop %v493
        %v495 = vmul.f32 %v484, 1.442695
        %v496 = vpow.pop %v495
        %v497 = vmul.f32 %v485, 1.442695
        %v498 = vpow.pop %v497
        %v499 = vmul.f32 %v486, 1.442695
        %v500 = vpow.pop %v499
        %v501 = vmul.f32 %v487, 1.442695
        %v502 = vpow.pop %v501
        %v503 = vmul.f32 %v488, 1.442695
        %v504 = vpow.pop %v503
        %v505 = vadd.f32 %v490, 1.0
        %v506 = vadd.f32 %v492, 1.0
        %v507 = vadd.f32 %v494, 1.0
        %v508 = vadd.f32 %v496, 1.0
        %v509 = vadd.f32 %v498, 1.0
        %v510 = vadd.f32 %v500, 1.0
        %v511 = vadd.f32 %v502, 1.0
        %v512 = vadd.f32 %v504, 1.0
        %v513 = vrcp.pop %v505
        %v514 = vmul.f32 1.0, %v513
        %v515 = vrcp.pop %v506
        %v516 = vmul.f32 1.0, %v515
        %v517 = vrcp.pop %v507
        %v518 = vmul.f32 1.0, %v517
        %v519 = vrcp.pop %v508
        %v520 = vmul.f32 1.0, %v519
        %v521 = vrcp.pop %v509
        %v522 = vmul.f32 1.0, %v521
        %v523 = vrcp.pop %v510
        %v524 = vmul.f32 1.0, %v523
        %v525 = vrcp.pop %v511
        %v526 = vmul.f32 1.0, %v525
        %v527 = vrcp.pop %v512
        %v528 = vmul.f32 1.0, %v527
        %v529 = vsub.f32 %v514, %v522
        %v530 = vsub.f32 %v516, %v524
        %v531 = vsub.f32 %v518, %v526
        %v532 = vsub.f32 %v520, %v528
        %v533 = vmul.f32 %v529, %v291
        %v534 = vmul.f32 %v530, %v292
        %v535 = vmul.f32 %v531, %v293
        %v536 = vmul.f32 %v532, %v294
        %v537 = vld [vmem:[%s3] sm:$0xff]
        %v538 = vld [vmem:[%s3 + $0x8] sm:$0xff]
        %v539 = vld [vmem:[%s3 + $0x10] sm:$0xff]
        %v540 = vld [vmem:[%s3 + $0x18] sm:$0xff]
        %542 = vset.pattern.permute.xlu0 0
        %543 = vperm.xlu0 %542, %v537
        %v544 = vpop.permute.xlu0 %543
        %547 = vset.pattern.permute.xlu0 0
        %548 = vperm.xlu0 %547, %v538
        %v549 = vpop.permute.xlu0 %548
        %552 = vset.pattern.permute.xlu0 0
        %553 = vperm.xlu0 %552, %v539
        %v554 = vpop.permute.xlu0 %553
        %557 = vset.pattern.permute.xlu0 0
        %558 = vperm.xlu0 %557, %v540
        %v559 = vpop.permute.xlu0 %558
        %v561 = vmul.f32 %v533, %v544
        %v562 = vmul.f32 %v534, %v549
        %v563 = vmul.f32 %v535, %v554
        %v564 = vmul.f32 %v536, %v559
        %v565 = vadd.f32 %v561, %v562
        %v566 = vadd.f32 %v565, %v563
        %v567 = vadd.f32 %v566, %v564
        %v568 = vrot.slane %v567, 4
        %v569 = vadd.f32 %v567, %v568
        %v570 = vrot.slane %v569, 2
        %v571 = vadd.f32 %v569, %v570
        %v572 = vrot.slane %v571, 1
        %v573 = vadd.f32 %v571, %v572
        %v574 = vld [vmem:[#allocation2] sm:$0x1]
        %576 = vset.pattern.permute.xlu0 0
        %577 = vperm.xlu0 %576, %v574
        %v578 = vpop.permute.xlu0 %577
        %v580 = vlaneseq
        %v581 = vshrl.u32 %v580, 7
        %v582 = vsub.s32 0, %v581
        %v583 = vrot.slane %v578, %v582
        %v584 = vadd.f32 %v573, %v583
        %v585 = vxor.u32 %v584, 2147483648
        %v586 = vmul.f32 %v585, 1.442695
        %v587 = vpow.pop %v586
        %v588 = vadd.f32 %v587, 1.0
        %v589 = vrcp.pop %v588
        %v590 = vmul.f32 1.0, %v589
        %591 = vst [vmem:[%s286] sm:$0x1] %v590
        %s592 = sand.u32 %s139, 1
        %s593 = scalar_lea.sflag [#allocation5], %s592
        %s594 = sand.u32 %s139, 1
        %s595 = scalar_lea.vmem [#allocation4], %s594
        // Predicated region
        $region79: #{tpu_custom_call.1} parent=73 // pred_check
          %p596 = pneg %p149
        $region80: #{tpu_custom_call.1} parent=73 // pred_check_branch
          %598 = sbr.rel (%p596) target = $region82
        $region81: #{tpu_custom_call.1} parent=73 // pred_region
          %s600 = ssub.s32 16, 16
          %601 = vsyncadd %s593, %s600
          %s602 = smul.addr %s21, 16
          %s603 = scalar_lea.hbm %s5, %s602
          %s605 = sshll.u32 %s595, 4
          %s606 = int_to_ptr.vmem [resolvable:$true] %s605
          %608 = dma.vmem_to_hbm [thread:$0]  %s606, 16, %s603, %s593
        $region82: #{tpu_custom_call.1} parent=73 // pred_fallthru
          _
      $region74: #{tpu_custom_call.1} parent=5 // pred_fallthru
        _
      %p609 = scmp.le.s32.totalorder 2, %s16
      // Predicated region
      $region83: #{tpu_custom_call.1} parent=5 // pred_check
        %p610 = pneg %p609
      $region84: #{tpu_custom_call.1} parent=5 // pred_check_branch
        %612 = sbr.rel (%p610) target = $region86
      $region85: #{tpu_custom_call.1} parent=5 // pred_region
        %s613 = ssub.s32 %s16, 2
        // Predicated region
        $region87: #{tpu_custom_call.1} parent=85 // pred_check
          %p614 = pneg %p155
        $region88: #{tpu_custom_call.1} parent=85 // pred_check_branch
          %616 = sbr.rel (%p614) target = $region90
        $region89: #{tpu_custom_call.1} parent=85 // pred_region
          %s617 = sand.u32 %s140, 1
          %s618 = scalar_lea.sflag [#allocation5], %s617
          %s619 = sand.u32 %s140, 1
          %s620 = scalar_lea.vmem [#allocation4], %s619
          %621 = dma.done %s618, 16
        $region90: #{tpu_custom_call.1} parent=85 // pred_fallthru
          _
      $region86: #{tpu_custom_call.1} parent=5 // pred_fallthru
        _
    $region6: #{tpu_custom_call.1} parent=1 // loop_footer
      %s20 = sadd.s32 1, %s16
    $region7: #{tpu_custom_call.1} parent=1 // loop_footer_branch
      %15 = sbr.rel target = $region3
    $region8: #{tpu_custom_call.1} parent=1 // loop_exit
      _
    %622 = vsyncpa [#allocation5], 1
    %s623 = scalar_lea.sflag [#allocation5], 1
    %624 = vsyncpa %s623, 1

</llo_original>
